<compile_context>
chip_gen: v7x
topology: tpu7x:2x2x1
jax: 0.10.0
libtpu: 0.0.40
codegen_flags: <defaults>
</compile_context>

<pallas_src>
import jax
import jax.numpy as jnp
from jax.experimental import pallas as pl
from jax.experimental.pallas import tpu as pltpu


def attention_kernel(dec_ref, enc_ref, mask_ref, wa_ref, wcc_ref, wcd_ref, bc_ref,
                     out_ref, attw_ref):
    """One batch tile of Luong-style attention for a single decoder step.

    dec_ref : (tb, H)     decoder output (native dtype)
    enc_ref : (S, tb, H)  encoder outputs in their NATIVE layout (no wrapper transpose)
    mask_ref: (S, tb, 1)  int32, nonzero = masked source position
    wa_ref  : (H, H)      W_a weight in PyTorch (out, in) layout
    wcc_ref : (H, H)      W_c[:, :H].T  (context half, (in, out))
    wcd_ref : (H, H)      W_c[:, H:].T  (decoder half, (in, out))
    bc_ref  : (1, H)      W_c bias
    out_ref : (tb, H)     tanh(W_c [context; dec] + b_c)
    attw_ref: (S, tb, 1)  attention weights (f32)
    """
    dec_f32 = dec_ref[...].astype(jnp.float32)                     # (tb, H)

    # Algebraic move of W_a to the decoder side:
    #   (W_a e + b_a) . dec = e . (W_a^T dec) + dec.b_a   (dec.b_a is softmax-invariant)
    q = jnp.dot(dec_f32, wa_ref[...].astype(jnp.float32),
                preferred_element_type=jnp.float32)                # (tb, H)

    enc = enc_ref[...].astype(jnp.float32)                         # (S, tb, H)

    # scores[s, b] = q[b] . enc[s, b, :]   (VPU multiply + lane reduction)
    scores = jnp.sum(enc * q[None, :, :], axis=-1, keepdims=True)  # (S, tb, 1)

    # masked_fill_(mask, -inf)
    scores = jnp.where(mask_ref[...] != 0, -jnp.inf, scores)

    # softmax over source positions; S is the outer slab axis -> cheap VPU reductions.
    m = jnp.max(scores, axis=0, keepdims=True)                     # (1, tb, 1)
    e = jnp.exp(scores - m)
    denom = jnp.sum(e, axis=0, keepdims=True)                      # (1, tb, 1)
    w = e * pl.reciprocal(denom, approx=True)                      # (S, tb, 1)
    attw_ref[...] = w.astype(attw_ref.dtype)

    # context[b, h] = sum_s w[s, b] * enc[s, b, h]  -- slab-accumulation over S (VPU)
    ctx = jnp.sum(w * enc, axis=0)                                 # (tb, H)

    # tanh(W_c [context; dec] + b_c), W_c split so no lane-axis concatenate is needed
    out = (jnp.dot(ctx, wcc_ref[...].astype(jnp.float32),
                   preferred_element_type=jnp.float32)
           + jnp.dot(dec_f32, wcd_ref[...].astype(jnp.float32),
                     preferred_element_type=jnp.float32)
           + bc_ref[...].astype(jnp.float32))
    out_ref[...] = jnp.tanh(out).astype(out_ref.dtype)


def _choose_batch_tile(batch, seq, hidden, max_tile_elems=512 * 1024):
    """Largest batch tile tb with tb == B or (tb % 8 == 0 and tb | B) such that one
    (S, tb, H) encoder tile is <= max_tile_elems elements (~2 MiB in f32).  The input
    tile is double-buffered and the kernel keeps a couple of f32 copies of it live, so
    this stays comfortably inside the VMEM limit requested below (and inside v7x's
    64 MiB physical VMEM)."""
    cands = {batch} | {t for t in range(8, batch, 8) if batch % t == 0}
    for tb in sorted(cands, reverse=True):
        if seq * tb * hidden <= max_tile_elems:
            return tb
    return min(cands)  # no divisor small enough; fall back to the smallest candidate


def attention_forward(decoder_output, encoder_outputs, mask, wa, ba, wc, bc):
    """decoder_output (B,1,H), encoder_outputs (S,B,H), mask (B,1,S) bool (True=masked),
    wa (H,H), ba (H,), wc (H,2H), bc (H,) in PyTorch nn.Linear (out,in) layout.
    Returns (concat_output (B,1,H), attention_weights (B,S))."""
    B, _, H = decoder_output.shape
    S = encoder_outputs.shape[0]
    del ba  # only shifts every unmasked score of a row equally -> softmax-invariant

    # --- layout plumbing on SMALL tensors only; the big encoder tensor is untouched
    #     and streams through the kernel exactly once in its native (S, B, H) layout ---
    dec2 = decoder_output.reshape(B, H)                           # contiguous, free
    mask_t = jnp.transpose(mask, (2, 0, 1)).astype(jnp.int32)     # (S, B, 1), tiny
    wc_ctx_t = wc[:, :H].T                                        # (H, H) (in, out)
    wc_dec_t = wc[:, H:].T                                        # (H, H) (in, out)
    bc2 = bc.reshape(1, H)

    tb = _choose_batch_tile(B, S, H)
    grid = (B // tb,)

    out2, attw3 = pl.pallas_call(
        attention_kernel,
        grid=grid,
        in_specs=[
            pl.BlockSpec((tb, H), lambda i: (i, 0)),              # decoder output
            pl.BlockSpec((S, tb, H), lambda i: (0, i, 0)),        # encoder (native layout)
            pl.BlockSpec((S, tb, 1), lambda i: (0, i, 0)),        # mask
            pl.BlockSpec((H, H), lambda i: (0, 0)),               # W_a (stays resident)
            pl.BlockSpec((H, H), lambda i: (0, 0)),               # W_c context half
            pl.BlockSpec((H, H), lambda i: (0, 0)),               # W_c decoder half
            pl.BlockSpec((1, H), lambda i: (0, 0)),               # b_c
        ],
        out_specs=(
            pl.BlockSpec((tb, H), lambda i: (i, 0)),
            pl.BlockSpec((S, tb, 1), lambda i: (0, i, 0)),
        ),
        out_shape=(
            jax.ShapeDtypeStruct((B, H), decoder_output.dtype),
            jax.ShapeDtypeStruct((S, B, 1), jnp.float32),
        ),
        compiler_params=pltpu.CompilerParams(
            dimension_semantics=("parallel",),                    # batch tiles across TCs
            vmem_limit_bytes=48 * 1024 * 1024,
        ),
    )(dec2, encoder_outputs, mask_t, wa, wc_ctx_t, wc_dec_t, bc2)

    # TODO(synk): the attention-weight output keeps its (S, tb, 1) in-kernel layout
    # (lane dim 1 -> masked partial stores); it is H× smaller than the encoder stream,
    # so a lane-dense relayout in-kernel would cost more (XLU) than the stores it saves.
    attw = jnp.transpose(attw3.reshape(S, B))                     # (B, S), tiny
    return out2.reshape(B, 1, H), attw


def reference_forward(decoder_output, encoder_outputs, mask, wa, ba, wc, bc):
    # pure-JAX replica of the PyTorch forward, for correctness check
    wa_enc = jnp.einsum('sbh,oh->sbo', encoder_outputs, wa) + ba          # (S,B,H)
    scores = jnp.einsum('bqh,bhs->bqs', decoder_output,
                        jnp.transpose(wa_enc, (1, 2, 0)))                 # (B,1,S)
    scores = jnp.where(mask, -jnp.inf, scores)
    weights = jax.nn.softmax(scores[:, 0, :], axis=1)[:, None, :]         # (B,1,S)
    context = jnp.einsum('bqs,bsh->bqh', weights,
                         jnp.transpose(encoder_outputs, (1, 0, 2)))       # (B,1,H)
    concat = jnp.concatenate([context, decoder_output], axis=-1)          # (B,1,2H)
    out = jnp.tanh(jnp.einsum('bqk,ok->bqo', concat, wc) + bc)            # (B,1,H)
    return out, weights[:, 0, :]


if __name__ == "__main__":
    B, S, H = 2, 8, 32
    key = jax.random.PRNGKey(0)
    k1, k2, k3, k4, k5, k6 = jax.random.split(key, 6)

    decoder_output = jax.random.normal(k1, (B, 1, H), dtype=jnp.float32)
    encoder_outputs = jax.random.normal(k2, (S, B, H), dtype=jnp.float32)

    # mask: True for padded source positions (per-batch lengths 8 and 5)
    lengths = jnp.array([8, 5])
    mask = (jnp.arange(S)[None, :] >= lengths[:, None])[:, None, :]       # (B,1,S) bool

    # deterministic "nn.Linear" parameters (weight layout: (out_features, in_features))
    wa = jax.random.normal(k3, (H, H), dtype=jnp.float32) * 0.1
    ba = jax.random.normal(k4, (H,), dtype=jnp.float32) * 0.1
    wc = jax.random.normal(k5, (H, 2 * H), dtype=jnp.float32) * 0.1
    bc = jax.random.normal(k6, (H,), dtype=jnp.float32) * 0.1

    out, attw = attention_forward(decoder_output, encoder_outputs, mask, wa, ba, wc, bc)
    jax.block_until_ready((out, attw))

    ref_out, ref_attw = reference_forward(decoder_output, encoder_outputs, mask,
                                          wa, ba, wc, bc)
    # tolerance covers pl.reciprocal(approx=True) in the softmax normalizer
    assert jnp.allclose(out, ref_out, atol=2e-3, rtol=2e-3), \
        float(jnp.max(jnp.abs(out - ref_out)))
    assert jnp.allclose(attw, ref_attw, atol=2e-3, rtol=2e-3), \
        float(jnp.max(jnp.abs(attw - ref_attw)))
    assert out.shape == (B, 1, H) and attw.shape == (B, S)

    print("KERNEL_OK")
</pallas_src>

<mosaic_0001>
module attributes {stable_mosaic.version = 11 : i64} {
  func.func @attention_kernel(%arg0: i32, %arg1: memref<2x32xf32, #tpu.memory_space<vmem>>, %arg2: memref<8x2x32xf32, #tpu.memory_space<vmem>>, %arg3: memref<8x2x1xi32, #tpu.memory_space<vmem>>, %arg4: memref<32x32xf32, #tpu.memory_space<vmem>>, %arg5: memref<32x32xf32, #tpu.memory_space<vmem>>, %arg6: memref<32x32xf32, #tpu.memory_space<vmem>>, %arg7: memref<1x32xf32, #tpu.memory_space<vmem>>, %arg8: memref<2x32xf32, #tpu.memory_space<vmem>>, %arg9: memref<8x2x1xf32, #tpu.memory_space<vmem>>) attributes {dimension_semantics = [#tpu.dimension_semantics<parallel>], iteration_bounds = array<i64: 1>, scalar_prefetch = 0 : i64, scratch_operands = 0 : i64, tpu.core_type = #tpu.core_type<tc>, window_params = [{transform_indices = @transform_0, window_bounds = array<i64: 2, 32>}, {transform_indices = @transform_1, window_bounds = array<i64: 8, 2, 32>}, {transform_indices = @transform_2, window_bounds = array<i64: 8, 2, 1>}, {pipeline_mode = #tpu.pipeline_mode<synchronous>, transform_indices = @transform_3, window_bounds = array<i64: 32, 32>}, {pipeline_mode = #tpu.pipeline_mode<synchronous>, transform_indices = @transform_4, window_bounds = array<i64: 32, 32>}, {pipeline_mode = #tpu.pipeline_mode<synchronous>, transform_indices = @transform_5, window_bounds = array<i64: 32, 32>}, {pipeline_mode = #tpu.pipeline_mode<synchronous>, transform_indices = @transform_6, window_bounds = array<i64: 1, 32>}, {transform_indices = @transform_7, window_bounds = array<i64: 2, 32>}, {transform_indices = @transform_8, window_bounds = array<i64: 8, 2, 1>}]} {
    %c0 = arith.constant 0 : index
    %c0_0 = arith.constant 0 : index
    %0 = vector.load %arg1[%c0, %c0_0] : memref<2x32xf32, #tpu.memory_space<vmem>>, vector<2x32xf32>
    %c0_1 = arith.constant 0 : index
    %c0_2 = arith.constant 0 : index
    %1 = vector.load %arg4[%c0_1, %c0_2] : memref<32x32xf32, #tpu.memory_space<vmem>>, vector<32x32xf32>
    %cst = arith.constant dense<0.000000e+00> : vector<2x32xf32>
    %2 = tpu.matmul %0, %1, %cst {dimension_numbers = #tpu.dot_dimension_numbers<[1], [0], [0], [1], [0, 0, 1, 1], [], []>} : vector<2x32xf32>, vector<32x32xf32>, vector<2x32xf32> -> vector<2x32xf32>
    %c0_3 = arith.constant 0 : index
    %c0_4 = arith.constant 0 : index
    %c0_5 = arith.constant 0 : index
    %3 = vector.load %arg2[%c0_3, %c0_4, %c0_5] : memref<8x2x32xf32, #tpu.memory_space<vmem>>, vector<8x2x32xf32>
    %4 = vector.shape_cast %2 : vector<2x32xf32> to vector<1x2x32xf32>
    %5 = vector.broadcast %4 : vector<1x2x32xf32> to vector<8x2x32xf32>
    %6 = arith.mulf %3, %5 : vector<8x2x32xf32>
    %cst_6 = arith.constant dense<0.000000e+00> : vector<8x2xf32>
    %7 = vector.multi_reduction <add>, %6, %cst_6 [2] : vector<8x2x32xf32> to vector<8x2xf32>
    %8 = vector.shape_cast %7 : vector<8x2xf32> to vector<8x2x1xf32>
    %c0_7 = arith.constant 0 : index
    %c0_8 = arith.constant 0 : index
    %c0_9 = arith.constant 0 : index
    %9 = vector.load %arg3[%c0_7, %c0_8, %c0_9] : memref<8x2x1xi32, #tpu.memory_space<vmem>>, vector<8x2x1xi32>
    %c0_i32 = arith.constant 0 : i32
    %10 = vector.broadcast %c0_i32 : i32 to vector<8x2x1xi32>
    %11 = arith.cmpi ne, %9, %10 : vector<8x2x1xi32>
    %cst_10 = arith.constant 0xFF800000 : f32
    %12 = vector.broadcast %cst_10 : f32 to vector<8x2x1xf32>
    %13 = arith.select %11, %12, %8 : vector<8x2x1xi1>, vector<8x2x1xf32>
    %cst_11 = arith.constant dense<0xFF800000> : vector<2x1xf32>
    %14 = vector.multi_reduction <maximumf>, %13, %cst_11 [0] : vector<8x2x1xf32> to vector<2x1xf32>
    %15 = vector.shape_cast %14 : vector<2x1xf32> to vector<1x2x1xf32>
    %16 = vector.broadcast %15 : vector<1x2x1xf32> to vector<8x2x1xf32>
    %17 = arith.subf %13, %16 : vector<8x2x1xf32>
    %18 = math.exp %17 : vector<8x2x1xf32>
    %cst_12 = arith.constant dense<0.000000e+00> : vector<2x1xf32>
    %19 = vector.multi_reduction <add>, %18, %cst_12 [0] : vector<8x2x1xf32> to vector<2x1xf32>
    %20 = vector.shape_cast %19 : vector<2x1xf32> to vector<1x2x1xf32>
    %21 = tpu.reciprocal %20 {approx = true} : vector<1x2x1xf32> -> vector<1x2x1xf32>
    %22 = vector.broadcast %21 : vector<1x2x1xf32> to vector<8x2x1xf32>
    %23 = arith.mulf %18, %22 : vector<8x2x1xf32>
    %c0_13 = arith.constant 0 : index
    %c0_14 = arith.constant 0 : index
    %c0_15 = arith.constant 0 : index
    %24 = vector.load %arg9[%c0_13, %c0_14, %c0_15] : memref<8x2x1xf32, #tpu.memory_space<vmem>>, vector<8x2x1xf32>
    tpu.vector_store %arg9[%c0_13, %c0_14, %c0_15], %23 {strides = array<i32>} : memref<8x2x1xf32, #tpu.memory_space<vmem>>, vector<8x2x1xf32>,
    %25 = vector.broadcast %23 : vector<8x2x1xf32> to vector<8x2x32xf32>
    %26 = arith.mulf %25, %3 : vector<8x2x32xf32>
    %cst_16 = arith.constant dense<0.000000e+00> : vector<2x32xf32>
    %27 = vector.multi_reduction <add>, %26, %cst_16 [0] : vector<8x2x32xf32> to vector<2x32xf32>
    %c0_17 = arith.constant 0 : index
    %c0_18 = arith.constant 0 : index
    %28 = vector.load %arg5[%c0_17, %c0_18] : memref<32x32xf32, #tpu.memory_space<vmem>>, vector<32x32xf32>
    %cst_19 = arith.constant dense<0.000000e+00> : vector<2x32xf32>
    %29 = tpu.matmul %27, %28, %cst_19 {dimension_numbers = #tpu.dot_dimension_numbers<[1], [0], [0], [1], [0, 0, 1, 1], [], []>} : vector<2x32xf32>, vector<32x32xf32>, vector<2x32xf32> -> vector<2x32xf32>
    %c0_20 = arith.constant 0 : index
    %c0_21 = arith.constant 0 : index
    %30 = vector.load %arg6[%c0_20, %c0_21] : memref<32x32xf32, #tpu.memory_space<vmem>>, vector<32x32xf32>
    %cst_22 = arith.constant dense<0.000000e+00> : vector<2x32xf32>
    %31 = tpu.matmul %0, %30, %cst_22 {dimension_numbers = #tpu.dot_dimension_numbers<[1], [0], [0], [1], [0, 0, 1, 1], [], []>} : vector<2x32xf32>, vector<32x32xf32>, vector<2x32xf32> -> vector<2x32xf32>
    %32 = arith.addf %29, %31 : vector<2x32xf32>
    %c0_23 = arith.constant 0 : index
    %c0_24 = arith.constant 0 : index
    %33 = vector.load %arg7[%c0_23, %c0_24] : memref<1x32xf32, #tpu.memory_space<vmem>>, vector<1x32xf32>
    %34 = vector.broadcast %33 : vector<1x32xf32> to vector<2x32xf32>
    %35 = arith.addf %32, %34 : vector<2x32xf32>
    %36 = math.tanh %35 : vector<2x32xf32>
    %c0_25 = arith.constant 0 : index
    %c0_26 = arith.constant 0 : index
    %37 = vector.load %arg8[%c0_25, %c0_26] : memref<2x32xf32, #tpu.memory_space<vmem>>, vector<2x32xf32>
    tpu.vector_store %arg8[%c0_25, %c0_26], %36 {strides = array<i32>} : memref<2x32xf32, #tpu.memory_space<vmem>>, vector<2x32xf32>,
    return
  }
  func.func @transform_0(%arg0: i32) -> (i32, i32) {
    %c0_i32 = arith.constant 0 : i32
    %c0_i32_0 = arith.constant 0 : i32
    return %arg0, %c0_i32 : i32, i32
  }
  func.func @transform_1(%arg0: i32) -> (i32, i32, i32) {
    %c0_i32 = arith.constant 0 : i32
    %c0_i32_0 = arith.constant 0 : i32
    %c0_i32_1 = arith.constant 0 : i32
    return %c0_i32, %arg0, %c0_i32_0 : i32, i32, i32
  }
  func.func @transform_2(%arg0: i32) -> (i32, i32, i32) {
    %c0_i32 = arith.constant 0 : i32
    %c0_i32_0 = arith.constant 0 : i32
    %c0_i32_1 = arith.constant 0 : i32
    return %c0_i32, %arg0, %c0_i32_0 : i32, i32, i32
  }
  func.func @transform_3(%arg0: i32) -> (i32, i32) {
    %c0_i32 = arith.constant 0 : i32
    %c0_i32_0 = arith.constant 0 : i32
    %c0_i32_1 = arith.constant 0 : i32
    return %c0_i32, %c0_i32_0 : i32, i32
  }
  func.func @transform_4(%arg0: i32) -> (i32, i32) {
    %c0_i32 = arith.constant 0 : i32
    %c0_i32_0 = arith.constant 0 : i32
    %c0_i32_1 = arith.constant 0 : i32
    return %c0_i32, %c0_i32_0 : i32, i32
  }
  func.func @transform_5(%arg0: i32) -> (i32, i32) {
    %c0_i32 = arith.constant 0 : i32
    %c0_i32_0 = arith.constant 0 : i32
    %c0_i32_1 = arith.constant 0 : i32
    return %c0_i32, %c0_i32_0 : i32, i32
  }
  func.func @transform_6(%arg0: i32) -> (i32, i32) {
    %c0_i32 = arith.constant 0 : i32
    %c0_i32_0 = arith.constant 0 : i32
    %c0_i32_1 = arith.constant 0 : i32
    return %c0_i32, %c0_i32_0 : i32, i32
  }
  func.func @transform_7(%arg0: i32) -> (i32, i32) {
    %c0_i32 = arith.constant 0 : i32
    %c0_i32_0 = arith.constant 0 : i32
    return %arg0, %c0_i32 : i32, i32
  }
  func.func @transform_8(%arg0: i32) -> (i32, i32, i32) {
    %c0_i32 = arith.constant 0 : i32
    %c0_i32_0 = arith.constant 0 : i32
    %c0_i32_1 = arith.constant 0 : i32
    return %c0_i32, %arg0, %c0_i32_0 : i32, i32, i32
  }
}

</mosaic_0001>

<llo_original>
// kernel: tpu_custom_call.1
$region0: #{tpu_custom_call.1}
  #allocation0 [shape = 'u32[]', space=smem, size = 0x4, offset = 0x4, fixed_abs, tag = 'smem constant byte address 0x4 - core index']
  #allocation1 [shape = 'u32[144,128]{1,0:T(1,128)}', space=vmem, size = 0x12000, scoped, tag = 'internal scratch']
  %s0 = inlined_call_operand.hbm [shape: f32[2,32], index: 0, kind: input, shape index: {}]
  %s1 = inlined_call_operand.hbm [shape: f32[8,2,32], index: 1, kind: input, shape index: {}]
  %s2 = inlined_call_operand.vmem [shape: s32[8,2,1], index: 2, kind: input, shape index: {}]
  %s3 = inlined_call_operand.hbm [shape: f32[32,32], index: 3, kind: input, shape index: {}]
  %s4 = inlined_call_operand.vmem [shape: f32[32,32], index: 4, kind: input, shape index: {}]
  %s5 = inlined_call_operand.hbm [shape: f32[32,32], index: 5, kind: input, shape index: {}]
  %s6 = inlined_call_operand.vmem [shape: f32[1,32], index: 6, kind: input, shape index: {}]
  %s7 = inlined_call_operand.hbm [shape: f32[2,32], index: 7, kind: output, shape index: {0}]
  %s8 = inlined_call_operand.vmem [shape: f32[8,2,1], index: 8, kind: output, shape index: {1}]
  %9 = xla_tuple %s7, %s8
  %s10 = sld [smem:[#allocation0]]
  $region62: #{tpu_custom_call.1} parent=0
    _
  %s12 = ssub.s32 1, %s10
  %s13 = scalar_select 0, %s12, %s10
  $region1: #{tpu_custom_call.1} parent=0
    #allocation2 [shape = 'u8[1024]{0}', space=vmem, size = 0x400, scoped, tag = 'input window, operand 0, single buffered']
    #allocation3 [shape = 's32[1]{0}', space=sflag, size = 0x4, scoped, tag = 'scoped memory for tpu_custom_call.1']
    #allocation4 [shape = 's32[1]{0}', space=sflag, size = 0x4, scoped, tag = 'scoped memory for tpu_custom_call.1']
    #allocation5 [shape = 'u8[8192]{0}', space=vmem, size = 0x2000, scoped, tag = 'input window, operand 1, single buffered']
    #allocation6 [shape = 's32[1]{0}', space=sflag, size = 0x4, scoped, tag = 'scoped memory for tpu_custom_call.1']
    #allocation7 [shape = 'u8[16384]{0}', space=vmem, size = 0x4000, scoped, tag = 'input window, operand 3, single buffered']
    #allocation8 [shape = 'u8[16384]{0}', space=vmem, size = 0x4000, scoped, tag = 'input window, operand 5, single buffered']
    #allocation9 [shape = 's32[1]{0}', space=sflag, size = 0x4, scoped, tag = 'scoped memory for tpu_custom_call.1']
    #allocation10 [shape = 'u8[1024]{0}', space=vmem, size = 0x400, scoped, tag = 'output window, operand 0, single buffered']
    %14 = vsyncpa [#allocation3], 0
    %15 = vsyncpa [#allocation6], 0
    %16 = vsyncpa [#allocation9], 0
    %17 = vsyncpa [#allocation4], 0
    // Predicated region
    $region2: #{tpu_custom_call.1} parent=1 // pred_check
      _
    $region3: #{tpu_custom_call.1} parent=1 // pred_check_branch
      %19 = sbr.rel (0) target = $region5
    $region4: #{tpu_custom_call.1} parent=1 // pred_region
      %s21 = ssub.s32 32, 32
      %22 = vsyncadd [#allocation3], %s21
      %s24 = sshll.u32 [#allocation2], 4
      %s25 = int_to_ptr.vmem [resolvable:$true] %s24
      %27 = dma.hbm_to_vmem [thread:$0]  %s0, 32, %s25, [#allocation3]
    $region5: #{tpu_custom_call.1} parent=1 // pred_fallthru
      _
    // Predicated region
    $region6: #{tpu_custom_call.1} parent=1 // pred_check
      _
    $region7: #{tpu_custom_call.1} parent=1 // pred_check_branch
      %29 = sbr.rel (0) target = $region9
    $region8: #{tpu_custom_call.1} parent=1 // pred_region
      %s31 = ssub.s32 256, 256
      %32 = vsyncadd [#allocation6], %s31
      %s33 = sshll.u32 [#allocation5], 4
      %s34 = int_to_ptr.vmem [resolvable:$true] %s33
      %39 = dma.hbm_to_vmem [thread:$0]  %s1, 256, %s34, [#allocation6], 32, 32, 2
    $region9: #{tpu_custom_call.1} parent=1 // pred_fallthru
      _
    // Predicated region
    $region10: #{tpu_custom_call.1} parent=1 // pred_check
      _
    $region11: #{tpu_custom_call.1} parent=1 // pred_check_branch
      %41 = sbr.rel (0) target = $region13
    $region12: #{tpu_custom_call.1} parent=1 // pred_region
      _
    $region13: #{tpu_custom_call.1} parent=1 // pred_fallthru
      _
    // Predicated region
    $region14: #{tpu_custom_call.1} parent=1 // pred_check
      _
    $region15: #{tpu_custom_call.1} parent=1 // pred_check_branch
      %43 = sbr.rel (0) target = $region17
    $region16: #{tpu_custom_call.1} parent=1 // pred_region
      %s45 = ssub.s32 512, 512
      %46 = vsyncadd [#allocation6], %s45
      %s47 = sshll.u32 [#allocation7], 4
      %s48 = int_to_ptr.vmem [resolvable:$true] %s47
      %53 = dma.hbm_to_vmem [thread:$0]  %s3, 512, %s48, [#allocation6], 128, 128, 8
    $region17: #{tpu_custom_call.1} parent=1 // pred_fallthru
      _
    // Predicated region
    $region18: #{tpu_custom_call.1} parent=1 // pred_check
      _
    $region19: #{tpu_custom_call.1} parent=1 // pred_check_branch
      %55 = sbr.rel (0) target = $region21
    $region20: #{tpu_custom_call.1} parent=1 // pred_region
      _
    $region21: #{tpu_custom_call.1} parent=1 // pred_fallthru
      _
    // Predicated region
    $region22: #{tpu_custom_call.1} parent=1 // pred_check
      _
    $region23: #{tpu_custom_call.1} parent=1 // pred_check_branch
      %57 = sbr.rel (0) target = $region25
    $region24: #{tpu_custom_call.1} parent=1 // pred_region
      %s59 = ssub.s32 512, 512
      %60 = vsyncadd [#allocation9], %s59
      %s61 = sshll.u32 [#allocation8], 4
      %s62 = int_to_ptr.vmem [resolvable:$true] %s61
      %67 = dma.hbm_to_vmem [thread:$0]  %s5, 512, %s62, [#allocation9], 128, 128, 8
    $region25: #{tpu_custom_call.1} parent=1 // pred_fallthru
      _
    // Predicated region
    $region26: #{tpu_custom_call.1} parent=1 // pred_check
      _
    $region27: #{tpu_custom_call.1} parent=1 // pred_check_branch
      %69 = sbr.rel (0) target = $region29
    $region28: #{tpu_custom_call.1} parent=1 // pred_region
      _
    $region29: #{tpu_custom_call.1} parent=1 // pred_fallthru
      _
    // Predicated region
    $region30: #{tpu_custom_call.1} parent=1 // pred_check
      _
    $region31: #{tpu_custom_call.1} parent=1 // pred_check_branch
      %71 = sbr.rel (0) target = $region33
    $region32: #{tpu_custom_call.1} parent=1 // pred_region
      %72 = dma.done [#allocation3], 32
    $region33: #{tpu_custom_call.1} parent=1 // pred_fallthru
      _
    // Predicated region
    $region34: #{tpu_custom_call.1} parent=1 // pred_check
      _
    $region35: #{tpu_custom_call.1} parent=1 // pred_check_branch
      %74 = sbr.rel (0) target = $region37
    $region36: #{tpu_custom_call.1} parent=1 // pred_region
      %75 = dma.done [#allocation6], 256
    $region37: #{tpu_custom_call.1} parent=1 // pred_fallthru
      _
    // Predicated region
    $region38: #{tpu_custom_call.1} parent=1 // pred_check
      _
    $region39: #{tpu_custom_call.1} parent=1 // pred_check_branch
      %77 = sbr.rel (0) target = $region41
    $region40: #{tpu_custom_call.1} parent=1 // pred_region
      %78 = dma.done [#allocation6], 512
    $region41: #{tpu_custom_call.1} parent=1 // pred_fallthru
      _
    // Predicated region
    $region42: #{tpu_custom_call.1} parent=1 // pred_check
      _
    $region43: #{tpu_custom_call.1} parent=1 // pred_check_branch
      %80 = sbr.rel (0) target = $region45
    $region44: #{tpu_custom_call.1} parent=1 // pred_region
      %81 = dma.done [#allocation9], 512
    $region45: #{tpu_custom_call.1} parent=1 // pred_fallthru
      _
    %v82 = vld [vmem:[#allocation2] sm:$0x3]
    %v83 = vld [vmem:[#allocation7] sm:$0xff]
    %v84 = vld [vmem:[#allocation7 + $0x8] sm:$0xff]
    %v85 = vld [vmem:[#allocation7 + $0x10] sm:$0xff]
    %v86 = vld [vmem:[#allocation7 + $0x18] sm:$0xff]
    %vm87 = vcmask 261120
    %v89 = vsel %vm87, %v82, 0
    %91 = vmatprep.subr.mxu0 0.0
    %92 = vmatpush1.msra.mxu0 %v83
    %93 = vmatprep.subr.mxu0 0.0
    %94 = vmatpush1.msra.mxu0 %v84
    %95 = vmatprep.subr.mxu0 0.0
    %96 = vmatpush1.msra.mxu0 %v85
    %97 = vmatprep.subr.mxu0 0.0
    %98 = vmatpush1.msra.mxu0 %v86
    %99 = vmatprep.subr.mxu0 0.0
    %100 = vmatpush1.msra.mxu0 0.0
    %101 = vmatprep.subr.mxu0 0.0
    %102 = vmatpush1.msra.mxu0 0.0
    %103 = vmatprep.subr.mxu0 0.0
    %104 = vmatpush1.msra.mxu0 0.0
    %105 = vmatprep.subr.mxu0 0.0
    %106 = vmatpush1.msra.mxu0 0.0
    %107 = vmatprep.subr.mxu0 0.0
    %108 = vmatpush1.msra.mxu0 0.0
    %109 = vmatprep.subr.mxu0 0.0
    %110 = vmatpush1.msra.mxu0 0.0
    %111 = vmatprep.subr.mxu0 0.0
    %112 = vmatpush1.msra.mxu0 0.0
    %113 = vmatprep.subr.mxu0 0.0
    %114 = vmatpush1.msra.mxu0 0.0
    %115 = vmatprep.subr.mxu0 0.0
    %116 = vmatpush1.msra.mxu0 0.0
    %117 = vmatprep.subr.mxu0 0.0
    %118 = vmatpush1.msra.mxu0 0.0
    %119 = vmatprep.subr.mxu0 0.0
    %120 = vmatpush1.msra.mxu0 0.0
    %121 = vmatprep.subr.mxu0 0.0
    %122 = vmatpush1.msra.mxu0 0.0
    %123 = vmatprep.subr.mxu0 0.0
    %124 = vmatpush1.msra.mxu0 0.0
    %125 = vmatprep.subr.mxu0 0.0
    %126 = vmatpush1.msra.mxu0 0.0
    %127 = vmatprep.subr.mxu0 0.0
    %128 = vmatpush1.msra.mxu0 0.0
    %129 = vmatprep.subr.mxu0 0.0
    %130 = vmatpush1.msra.mxu0 0.0
    %131 = vmatprep.subr.mxu0 0.0
    %132 = vmatpush1.msra.mxu0 0.0
    %133 = vmatprep.subr.mxu0 0.0
    %134 = vmatpush1.msra.mxu0 0.0
    %135 = vmatprep.subr.mxu0 0.0
    %136 = vmatpush1.msra.mxu0 0.0
    %137 = vmatprep.subr.mxu0 0.0
    %138 = vmatpush1.msra.mxu0 0.0
    %139 = vmatprep.subr.mxu0 0.0
    %140 = vmatpush1.msra.mxu0 0.0
    %141 = vmatprep.subr.mxu0 0.0
    %142 = vmatpush1.msra.mxu0 0.0
    %143 = vmatprep.subr.mxu0 0.0
    %144 = vmatpush1.msra.mxu0 0.0
    %145 = vmatprep.subr.mxu0 0.0
    %146 = vmatpush1.msra.mxu0 0.0
    %147 = vmatprep.subr.mxu0 0.0
    %148 = vmatpush1.msra.mxu0 0.0
    %149 = vmatprep.subr.mxu0 0.0
    %150 = vmatpush1.msra.mxu0 0.0
    %151 = vmatprep.subr.mxu0 0.0
    %152 = vmatpush1.msra.mxu0 0.0
    %153 = vmatprep.subr.mxu0 0.0
    %154 = vmatpush1.msra.mxu0 0.0
    %155 = vmatprep.mubr.f32.mxu0 0.0
    %156 = vmatmul.mubr.f32.gmra.mrb[0].mxu0 %v89
    %v157 = vpop.f32.mrb[0].mxu0
    %v158 = vadd.f32 0.0, %v157
    %v159 = vpop.f32.mrb[0].mxu0
    %160 = vdwg.mxu0
    %v161 = vld [vmem:[#allocation5] sm:$0x3]
    %v162 = vld [vmem:[#allocation5 + $0x2] sm:$0x3]
    %v163 = vld [vmem:[#allocation5 + $0x4] sm:$0x3]
    %v164 = vld [vmem:[#allocation5 + $0x6] sm:$0x3]
    %v165 = vld [vmem:[#allocation5 + $0x8] sm:$0x3]
    %v166 = vld [vmem:[#allocation5 + $0xa] sm:$0x3]
    %v167 = vld [vmem:[#allocation5 + $0xc] sm:$0x3]
    %v168 = vld [vmem:[#allocation5 + $0xe] sm:$0x3]
    %v169 = vmul.f32 %v161, %v158
    %v170 = vmul.f32 %v162, %v158
    %v171 = vmul.f32 %v163, %v158
    %v172 = vmul.f32 %v164, %v158
    %v173 = vmul.f32 %v165, %v158
    %v174 = vmul.f32 %v166, %v158
    %v175 = vmul.f32 %v167, %v158
    %v176 = vmul.f32 %v168, %v158
    %vm177 = vcmask 254976
    %v178 = vsel %vm177, %v169, 0.0
    %179 = vadd.xlane.f32.xlu0 %v178
    %v180 = vpop.xlane.xlu0 %179
    %v181 = vsel %vm177, %v170, 0.0
    %182 = vadd.xlane.f32.xlu0 %v181
    %v183 = vpop.xlane.xlu0 %182
    %v184 = vsel %vm177, %v171, 0.0
    %185 = vadd.xlane.f32.xlu0 %v184
    %v186 = vpop.xlane.xlu0 %185
    %v187 = vsel %vm177, %v172, 0.0
    %188 = vadd.xlane.f32.xlu0 %v187
    %v189 = vpop.xlane.xlu0 %188
    %v190 = vsel %vm177, %v173, 0.0
    %191 = vadd.xlane.f32.xlu0 %v190
    %v192 = vpop.xlane.xlu0 %191
    %v193 = vsel %vm177, %v174, 0.0
    %194 = vadd.xlane.f32.xlu0 %v193
    %v195 = vpop.xlane.xlu0 %194
    %v196 = vsel %vm177, %v175, 0.0
    %197 = vadd.xlane.f32.xlu0 %v196
    %v198 = vpop.xlane.xlu0 %197
    %v199 = vsel %vm177, %v176, 0.0
    %200 = vadd.xlane.f32.xlu0 %v199
    %v201 = vpop.xlane.xlu0 %200
    %v202 = vld [vmem:[%s2] sm:$0x3]
    %v203 = vld [vmem:[%s2 + $0x2] sm:$0x3]
    %v204 = vld [vmem:[%s2 + $0x4] sm:$0x3]
    %v205 = vld [vmem:[%s2 + $0x6] sm:$0x3]
    %v206 = vld [vmem:[%s2 + $0x8] sm:$0x3]
    %v207 = vld [vmem:[%s2 + $0xa] sm:$0x3]
    %v208 = vld [vmem:[%s2 + $0xc] sm:$0x3]
    %v209 = vld [vmem:[%s2 + $0xe] sm:$0x3]
    %vm210 = vcmp.ne.s32.totalorder %v202, 0
    %vm211 = vcmp.ne.s32.totalorder %v203, 0
    %vm212 = vcmp.ne.s32.totalorder %v204, 0
    %vm213 = vcmp.ne.s32.totalorder %v205, 0
    %vm214 = vcmp.ne.s32.totalorder %v206, 0
    %vm215 = vcmp.ne.s32.totalorder %v207, 0
    %vm216 = vcmp.ne.s32.totalorder %v208, 0
    %vm217 = vcmp.ne.s32.totalorder %v209, 0
    %v218 = vsel %vm210, -inf, %v180
    %v219 = vsel %vm211, -inf, %v183
    %v220 = vsel %vm212, -inf, %v186
    %v221 = vsel %vm213, -inf, %v189
    %v222 = vsel %vm214, -inf, %v192
    %v223 = vsel %vm215, -inf, %v195
    %v224 = vsel %vm216, -inf, %v198
    %v225 = vsel %vm217, -inf, %v201
    %vm226 = vcmask 1024
    %v227 = vsel %vm226, %v218, -inf
    %v228 = vsel %vm226, %v219, -inf
    %v229 = vsel %vm226, %v220, -inf
    %v230 = vsel %vm226, %v221, -inf
    %v231 = vsel %vm226, %v222, -inf
    %v232 = vmax.f32 %v227, %v231
    %v233 = vsel %vm226, %v223, -inf
    %v234 = vmax.f32 %v228, %v233
    %v235 = vsel %vm226, %v224, -inf
    %v236 = vmax.f32 %v229, %v235
    %v237 = vsel %vm226, %v225, -inf
    %v238 = vmax.f32 %v230, %v237
    %v239 = vmax.f32 %v232, %v234
    %v240 = vmax.f32 %v236, %v238
    %v241 = vmax.f32 %v239, %v240
    %v242 = vsub.f32 %v218, %v241
    %v243 = vsub.f32 %v219, %v241
    %v244 = vsub.f32 %v220, %v241
    %v245 = vsub.f32 %v221, %v241
    %v246 = vsub.f32 %v222, %v241
    %v247 = vsub.f32 %v223, %v241
    %v248 = vsub.f32 %v224, %v241
    %v249 = vsub.f32 %v225, %v241
    %v250 = vmul.f32 %v242, 1.442695
    %v251 = vpow.pop %v250
    %v252 = vmul.f32 %v243, 1.442695
    %v253 = vpow.pop %v252
    %v254 = vmul.f32 %v244, 1.442695
    %v255 = vpow.pop %v254
    %v256 = vmul.f32 %v245, 1.442695
    %v257 = vpow.pop %v256
    %v258 = vmul.f32 %v246, 1.442695
    %v259 = vpow.pop %v258
    %v260 = vmul.f32 %v247, 1.442695
    %v261 = vpow.pop %v260
    %v262 = vmul.f32 %v248, 1.442695
    %v263 = vpow.pop %v262
    %v264 = vmul.f32 %v249, 1.442695
    %v265 = vpow.pop %v264
    %v266 = vsel %vm226, %v251, 0.0
    %v267 = vsel %vm226, %v253, 0.0
    %v268 = vadd.f32 %v266, %v267
    %v269 = vsel %vm226, %v255, 0.0
    %v270 = vadd.f32 %v268, %v269
    %v271 = vsel %vm226, %v257, 0.0
    %v272 = vadd.f32 %v270, %v271
    %v273 = vsel %vm226, %v259, 0.0
    %v274 = vadd.f32 %v272, %v273
    %v275 = vsel %vm226, %v261, 0.0
    %v276 = vadd.f32 %v274, %v275
    %v277 = vsel %vm226, %v263, 0.0
    %v278 = vadd.f32 %v276, %v277
    %v279 = vsel %vm226, %v265, 0.0
    %v280 = vadd.f32 %v278, %v279
    %v281 = vrcp.pop %v280
    %v282 = vmul.f32 %v251, %v281
    %v283 = vmul.f32 %v253, %v281
    %v284 = vmul.f32 %v255, %v281
    %v285 = vmul.f32 %v257, %v281
    %v286 = vmul.f32 %v259, %v281
    %v287 = vmul.f32 %v261, %v281
    %v288 = vmul.f32 %v263, %v281
    %v289 = vmul.f32 %v265, %v281
    %290 = vst.msk [vmem:[%s8] sm:$0x3] %vm226, %v282
    %291 = vst.msk [vmem:[%s8 + $0x2] sm:$0x3] %vm226, %v283
    %292 = vst.msk [vmem:[%s8 + $0x4] sm:$0x3] %vm226, %v284
    %293 = vst.msk [vmem:[%s8 + $0x6] sm:$0x3] %vm226, %v285
    %294 = vst.msk [vmem:[%s8 + $0x8] sm:$0x3] %vm226, %v286
    %295 = vst.msk [vmem:[%s8 + $0xa] sm:$0x3] %vm226, %v287
    %296 = vst.msk [vmem:[%s8 + $0xc] sm:$0x3] %vm226, %v288
    %297 = vst.msk [vmem:[%s8 + $0xe] sm:$0x3] %vm226, %v289
    %299 = vset.pattern.permute.xlu0 0
    %300 = vperm.xlu0 %299, %v282
    %v301 = vpop.permute.xlu0 %300
    %304 = vset.pattern.permute.xlu0 0
    %305 = vperm.xlu0 %304, %v283
    %v306 = vpop.permute.xlu0 %305
    %309 = vset.pattern.permute.xlu0 0
    %310 = vperm.xlu0 %309, %v284
    %v311 = vpop.permute.xlu0 %310
    %314 = vset.pattern.permute.xlu0 0
    %315 = vperm.xlu0 %314, %v285
    %v316 = vpop.permute.xlu0 %315
    %319 = vset.pattern.permute.xlu0 0
    %320 = vperm.xlu0 %319, %v286
    %v321 = vpop.permute.xlu0 %320
    %324 = vset.pattern.permute.xlu0 0
    %325 = vperm.xlu0 %324, %v287
    %v326 = vpop.permute.xlu0 %325
    %329 = vset.pattern.permute.xlu0 0
    %330 = vperm.xlu0 %329, %v288
    %v331 = vpop.permute.xlu0 %330
    %334 = vset.pattern.permute.xlu0 0
    %335 = vperm.xlu0 %334, %v289
    %v336 = vpop.permute.xlu0 %335
    %v338 = vmul.f32 %v301, %v161
    %v339 = vmul.f32 %v306, %v162
    %v340 = vmul.f32 %v311, %v163
    %v341 = vmul.f32 %v316, %v164
    %v342 = vmul.f32 %v321, %v165
    %v343 = vmul.f32 %v326, %v166
    %v344 = vmul.f32 %v331, %v167
    %v345 = vmul.f32 %v336, %v168
    %v346 = vsel %vm177, %v338, 0.0
    %v347 = vsel %vm177, %v339, 0.0
    %v348 = vadd.f32 %v346, %v347
    %v349 = vsel %vm177, %v340, 0.0
    %v350 = vadd.f32 %v348, %v349
    %v351 = vsel %vm177, %v341, 0.0
    %v352 = vadd.f32 %v350, %v351
    %v353 = vsel %vm177, %v342, 0.0
    %v354 = vadd.f32 %v352, %v353
    %v355 = vsel %vm177, %v343, 0.0
    %v356 = vadd.f32 %v354, %v355
    %v357 = vsel %vm177, %v344, 0.0
    %v358 = vadd.f32 %v356, %v357
    %v359 = vsel %vm177, %v345, 0.0
    %v360 = vadd.f32 %v358, %v359
    %v361 = vld [vmem:[%s4] sm:$0xff]
    %v362 = vld [vmem:[%s4 + $0x8] sm:$0xff]
    %v363 = vld [vmem:[%s4 + $0x10] sm:$0xff]
    %v364 = vld [vmem:[%s4 + $0x18] sm:$0xff]
    %v365 = vld [vmem:[#allocation8] sm:$0xff]
    %v366 = vld [vmem:[#allocation8 + $0x8] sm:$0xff]
    %v367 = vld [vmem:[#allocation8 + $0x10] sm:$0xff]
    %v368 = vld [vmem:[#allocation8 + $0x18] sm:$0xff]
    %369 = vmatprep.subr.mxu0 0.0
    %370 = vmatpush1.msra.mxu0 %v365
    %371 = vmatprep.subr.mxu0 0.0
    %372 = vmatpush1.msra.mxu0 %v366
    %373 = vmatprep.subr.mxu0 0.0
    %374 = vmatpush1.msra.mxu0 %v367
    %375 = vmatprep.subr.mxu0 0.0
    %376 = vmatpush1.msra.mxu0 %v368
    %377 = vmatprep.subr.mxu0 0.0
    %378 = vmatpush1.msra.mxu0 0.0
    %379 = vmatprep.subr.mxu0 0.0
    %380 = vmatpush1.msra.mxu0 0.0
    %381 = vmatprep.subr.mxu0 0.0
    %382 = vmatpush1.msra.mxu0 0.0
    %383 = vmatprep.subr.mxu0 0.0
    %384 = vmatpush1.msra.mxu0 0.0
    %385 = vmatprep.subr.mxu0 0.0
    %386 = vmatpush1.msra.mxu0 0.0
    %387 = vmatprep.subr.mxu0 0.0
    %388 = vmatpush1.msra.mxu0 0.0
    %389 = vmatprep.subr.mxu0 0.0
    %390 = vmatpush1.msra.mxu0 0.0
    %391 = vmatprep.subr.mxu0 0.0
    %392 = vmatpush1.msra.mxu0 0.0
    %393 = vmatprep.subr.mxu0 0.0
    %394 = vmatpush1.msra.mxu0 0.0
    %395 = vmatprep.subr.mxu0 0.0
    %396 = vmatpush1.msra.mxu0 0.0
    %397 = vmatprep.subr.mxu0 0.0
    %398 = vmatpush1.msra.mxu0 0.0
    %399 = vmatprep.subr.mxu0 0.0
    %400 = vmatpush1.msra.mxu0 0.0
    %401 = vmatprep.subr.mxu0 0.0
    %402 = vmatpush1.msra.mxu0 0.0
    %403 = vmatprep.subr.mxu0 0.0
    %404 = vmatpush1.msra.mxu0 0.0
    %405 = vmatprep.subr.mxu0 0.0
    %406 = vmatpush1.msra.mxu0 0.0
    %407 = vmatprep.subr.mxu0 0.0
    %408 = vmatpush1.msra.mxu0 0.0
    %409 = vmatprep.subr.mxu0 0.0
    %410 = vmatpush1.msra.mxu0 0.0
    %411 = vmatprep.subr.mxu0 0.0
    %412 = vmatpush1.msra.mxu0 0.0
    %413 = vmatprep.subr.mxu0 0.0
    %414 = vmatpush1.msra.mxu0 0.0
    %415 = vmatprep.subr.mxu0 0.0
    %416 = vmatpush1.msra.mxu0 0.0
    %417 = vmatprep.subr.mxu0 0.0
    %418 = vmatpush1.msra.mxu0 0.0
    %419 = vmatprep.subr.mxu0 0.0
    %420 = vmatpush1.msra.mxu0 0.0
    %421 = vmatprep.subr.mxu0 0.0
    %422 = vmatpush1.msra.mxu0 0.0
    %423 = vmatprep.subr.mxu0 0.0
    %424 = vmatpush1.msra.mxu0 0.0
    %425 = vmatprep.subr.mxu0 0.0
    %426 = vmatpush1.msra.mxu0 0.0
    %427 = vmatprep.subr.mxu0 0.0
    %428 = vmatpush1.msra.mxu0 0.0
    %429 = vmatprep.subr.mxu0 0.0
    %430 = vmatpush1.msra.mxu0 0.0
    %431 = vmatprep.subr.mxu0 0.0
    %432 = vmatpush1.msra.mxu0 0.0
    %433 = vmatprep.mubr.f32.mxu0 0.0
    %434 = vmatmul.mubr.f32.gmra.mrb[0].mxu0 %v89
    %v435 = vpop.f32.mrb[0].mxu0
    %v436 = vadd.f32 0.0, %v435
    %v437 = vpop.f32.mrb[0].mxu0
    %438 = vdwg.mxu0
    %v440 = vsel %vm87, %v360, 0
    %442 = vmatprep.subr.mxu0 0.0
    %443 = vmatpush1.msra.mxu0 %v361
    %444 = vmatprep.subr.mxu0 0.0
    %445 = vmatpush1.msra.mxu0 %v362
    %446 = vmatprep.subr.mxu0 0.0
    %447 = vmatpush1.msra.mxu0 %v363
    %448 = vmatprep.subr.mxu0 0.0
    %449 = vmatpush1.msra.mxu0 %v364
    %450 = vmatprep.subr.mxu0 0.0
    %451 = vmatpush1.msra.mxu0 0.0
    %452 = vmatprep.subr.mxu0 0.0
    %453 = vmatpush1.msra.mxu0 0.0
    %454 = vmatprep.subr.mxu0 0.0
    %455 = vmatpush1.msra.mxu0 0.0
    %456 = vmatprep.subr.mxu0 0.0
    %457 = vmatpush1.msra.mxu0 0.0
    %458 = vmatprep.subr.mxu0 0.0
    %459 = vmatpush1.msra.mxu0 0.0
    %460 = vmatprep.subr.mxu0 0.0
    %461 = vmatpush1.msra.mxu0 0.0
    %462 = vmatprep.subr.mxu0 0.0
    %463 = vmatpush1.msra.mxu0 0.0
    %464 = vmatprep.subr.mxu0 0.0
    %465 = vmatpush1.msra.mxu0 0.0
    %466 = vmatprep.subr.mxu0 0.0
    %467 = vmatpush1.msra.mxu0 0.0
    %468 = vmatprep.subr.mxu0 0.0
    %469 = vmatpush1.msra.mxu0 0.0
    %470 = vmatprep.subr.mxu0 0.0
    %471 = vmatpush1.msra.mxu0 0.0
    %472 = vmatprep.subr.mxu0 0.0
    %473 = vmatpush1.msra.mxu0 0.0
    %474 = vmatprep.subr.mxu0 0.0
    %475 = vmatpush1.msra.mxu0 0.0
    %476 = vmatprep.subr.mxu0 0.0
    %477 = vmatpush1.msra.mxu0 0.0
    %478 = vmatprep.subr.mxu0 0.0
    %479 = vmatpush1.msra.mxu0 0.0
    %480 = vmatprep.subr.mxu0 0.0
    %481 = vmatpush1.msra.mxu0 0.0
    %482 = vmatprep.subr.mxu0 0.0
    %483 = vmatpush1.msra.mxu0 0.0
    %484 = vmatprep.subr.mxu0 0.0
    %485 = vmatpush1.msra.mxu0 0.0
    %486 = vmatprep.subr.mxu0 0.0
    %487 = vmatpush1.msra.mxu0 0.0
    %488 = vmatprep.subr.mxu0 0.0
    %489 = vmatpush1.msra.mxu0 0.0
    %490 = vmatprep.subr.mxu0 0.0
    %491 = vmatpush1.msra.mxu0 0.0
    %492 = vmatprep.subr.mxu0 0.0
    %493 = vmatpush1.msra.mxu0 0.0
    %494 = vmatprep.subr.mxu0 0.0
    %495 = vmatpush1.msra.mxu0 0.0
    %496 = vmatprep.subr.mxu0 0.0
    %497 = vmatpush1.msra.mxu0 0.0
    %498 = vmatprep.subr.mxu0 0.0
    %499 = vmatpush1.msra.mxu0 0.0
    %500 = vmatprep.subr.mxu0 0.0
    %501 = vmatpush1.msra.mxu0 0.0
    %502 = vmatprep.subr.mxu0 0.0
    %503 = vmatpush1.msra.mxu0 0.0
    %504 = vmatprep.subr.mxu0 0.0
    %505 = vmatpush1.msra.mxu0 0.0
    %506 = vmatprep.mubr.f32.mxu0 0.0
    %507 = vmatmul.mubr.f32.gmra.mrb[0].mxu0 %v440
    %v508 = vpop.f32.mrb[0].mxu0
    %v509 = vadd.f32 %v436, %v508
    %v510 = vpop.f32.mrb[0].mxu0
    %511 = vdwg.mxu0
    %v512 = vld [vmem:[%s6] sm:$0x1]
    %v514 = vlaneseq
    %v515 = vshrl.u32 %v514, 7
    %v516 = vsub.s32 0, %v515
    %v517 = vrot.slane %v512, %v516
    %v519 = vadd.f32 %v509, %v517
    %v520 = vtanh.pop %v519
    %521 = vst.msk [vmem:[#allocation10] sm:$0x3] %vm177, %v520
    // Predicated region
    $region46: #{tpu_custom_call.1} parent=1 // pred_check
      _
    $region47: #{tpu_custom_call.1} parent=1 // pred_check_branch
      %523 = sbr.rel (0) target = $region49
    $region48: #{tpu_custom_call.1} parent=1 // pred_region
      %s525 = ssub.s32 32, 32
      %526 = vsyncadd [#allocation4], %s525
      %s528 = sshll.u32 [#allocation10], 4
      %s529 = int_to_ptr.vmem [resolvable:$true] %s528
      %531 = dma.vmem_to_hbm [thread:$0]  %s529, 32, %s7, [#allocation4]
    $region49: #{tpu_custom_call.1} parent=1 // pred_fallthru
      _
    // Predicated region
    $region50: #{tpu_custom_call.1} parent=1 // pred_check
      _
    $region51: #{tpu_custom_call.1} parent=1 // pred_check_branch
      %533 = sbr.rel (0) target = $region53
    $region52: #{tpu_custom_call.1} parent=1 // pred_region
      _
    $region53: #{tpu_custom_call.1} parent=1 // pred_fallthru
      _
    // Predicated region
    $region54: #{tpu_custom_call.1} parent=1 // pred_check
      _
    $region55: #{tpu_custom_call.1} parent=1 // pred_check_branch
      %535 = sbr.rel (0) target = $region57
    $region56: #{tpu_custom_call.1} parent=1 // pred_region
      %536 = dma.done [#allocation4], 32
    $region57: #{tpu_custom_call.1} parent=1 // pred_fallthru
      _
    // Predicated region
    $region58: #{tpu_custom_call.1} parent=1 // pred_check
      _
    $region59: #{tpu_custom_call.1} parent=1 // pred_check_branch
      %538 = sbr.rel (0) target = $region61
    $region60: #{tpu_custom_call.1} parent=1 // pred_region
      _
    $region61: #{tpu_custom_call.1} parent=1 // pred_fallthru
      _
    %539 = vsyncpa [#allocation3], 1
    %540 = vsyncpa [#allocation6], 1
    %541 = vsyncpa [#allocation9], 1
    %542 = vsyncpa [#allocation4], 1

</llo_original>
